<compile_context>
chip_gen: v5e
topology: v5e:2x2
jax: 0.10.0
libtpu: 0.0.40
codegen_flags: <defaults>
</compile_context>

<pallas_src>
import functools

import jax
import jax.numpy as jnp
from jax.experimental import pallas as pl
from jax.experimental.pallas import tpu as pltpu


# ----------------------------- fused Pallas kernel --------------------------

def _fused_classifier_kernel(x_ref, c1_ref,
                             m2_ref, b2_ref,
                             m3_ref, b3_ref,
                             m4_ref, b4_ref,
                             w5_ref, b5_ref,
                             w6_ref, b6_ref,
                             out_ref,
                             *, conv1_out_ch, conv1_in_ch, conv1_hw):
    """Whole ClassifierNN forward for one batch tile, entirely in VMEM.

    x_ref : (TB, Cin*4*conv1_hw) bf16, tap-major space-to-depth layout.
    c1_ref: SMEM f32 vector [conv1 weights (co,ci,kh,kw row-major), conv1 bias].
    m*/w* : bf16 folded / zero-padded weight matrices; b*: f32 (1, width).
    """
    xt = x_ref[...]                                   # (TB, Cin*4*HW1) bf16

    # ---- conv1 + ReLU: a handful of VPU scaled adds (no MXU, no zeros) -----
    n_w = conv1_out_ch * conv1_in_ch * 4
    chunks = []
    for co in range(conv1_out_ch):
        acc = jnp.zeros((xt.shape[0], conv1_hw), jnp.float32)
        for ci in range(conv1_in_ch):
            for a in range(2):
                for b in range(2):
                    tap = (ci * 2 + a) * 2 + b
                    widx = ((co * conv1_in_ch + ci) * 2 + a) * 2 + b
                    sl = xt[:, tap * conv1_hw:(tap + 1) * conv1_hw]
                    acc = acc + c1_ref[widx] * sl.astype(jnp.float32)
        acc = acc + c1_ref[n_w + co]
        chunks.append(jnp.maximum(acc, 0.0))
    h = jnp.concatenate(chunks, axis=-1).astype(jnp.bfloat16)

    # ---- conv2..conv4 + fc1: lane-dense bf16 MXU matmuls, f32 accumulation -
    def dense_relu(h, w_ref, b_ref):
        y = jnp.dot(h, w_ref[...], preferred_element_type=jnp.float32)
        return jnp.maximum(y + b_ref[...], 0.0).astype(jnp.bfloat16)

    h = dense_relu(h, m2_ref, b2_ref)   # conv2 -> (TB, 128)
    h = dense_relu(h, m3_ref, b3_ref)   # conv3 -> (TB, 128) (64 real + pad)
    h = dense_relu(h, m4_ref, b4_ref)   # conv4 -> (TB, 128) (32 real + pad)
    h = dense_relu(h, w5_ref, b5_ref)   # fc1   -> (TB, 128)

    # ---- fc2 + log_softmax; padded logits carry bias -1e30 -> exp() == 0 ---
    y = jnp.dot(h, w6_ref[...], preferred_element_type=jnp.float32) + b6_ref[...]
    m = jnp.max(y, axis=-1, keepdims=True)
    lse = jnp.log(jnp.sum(jnp.exp(y - m), axis=-1, keepdims=True))
    out_ref[...] = (y - m - lse).astype(out_ref.dtype)


# --------------------------- parameter preparation --------------------------

def init_params(key, kernel_size=2, init_channels=1, image_channels=1,
                output_dim=10):
    """Deterministic synthetic parameters with PyTorch-shaped tensors."""
    ks = jax.random.split(key, 12)

    def uniform(k, shape, fan_in):
        bound = 1.0 / jnp.sqrt(jnp.float32(fan_in))
        return jax.random.uniform(k, shape, jnp.float32, -bound, bound)

    c = init_channels
    conv_shapes = [
        (c,     image_channels, kernel_size, kernel_size),
        (c * 2, c,              kernel_size, kernel_size),
        (c * 4, c * 2,          kernel_size, kernel_size),
        (c * 8, c * 4,          kernel_size, kernel_size),
    ]
    params = {}
    ki = 0
    for i, shp in enumerate(conv_shapes, start=1):
        fan_in = shp[1] * shp[2] * shp[3]
        params[f"conv{i}_w"] = uniform(ks[ki], shp, fan_in); ki += 1
        params[f"conv{i}_b"] = uniform(ks[ki], (shp[0],), fan_in); ki += 1

    conv_output_size = (c * 8) * 2 * 2        # 32x32 input -> (8c, 2, 2)
    params["fc1_w"] = uniform(ks[ki], (128, conv_output_size), conv_output_size); ki += 1
    params["fc1_b"] = uniform(ks[ki], (128,), conv_output_size); ki += 1
    params["fc2_w"] = uniform(ks[ki], (output_dim, 128), 128); ki += 1
    params["fc2_b"] = uniform(ks[ki], (output_dim,), 128); ki += 1
    return params


def _conv_s2_as_dense(w, h_in, w_in):
    """Fold Conv2d(kernel=2, stride=2, pad=0) weights (C_out, C_in, kh, kw)
    into a dense matrix M so that flat_out = flat_in @ M, with flat_* in
    PyTorch's (C, H, W) row-major flatten order."""
    c_out, c_in, kh, kw = w.shape
    h_out = (h_in - kh) // 2 + 1
    w_out = (w_in - kw) // 2 + 1
    dt = w.dtype
    eh = (jnp.arange(h_in)[None, :, None]
          == 2 * jnp.arange(h_out)[None, None, :]
          + jnp.arange(kh)[:, None, None]).astype(dt)      # (kh, H, Ho)
    ew = (jnp.arange(w_in)[None, :, None]
          == 2 * jnp.arange(w_out)[None, None, :]
          + jnp.arange(kw)[:, None, None]).astype(dt)      # (kw, W, Wo)
    m6 = jnp.einsum("ocab,ahx,bwy->chwoxy", w, eh, ew)
    return m6.reshape(c_in * h_in * w_in, c_out * h_out * w_out), (h_out, w_out)


def _round_up(n, m):
    return ((n + m - 1) // m) * m


def prepare_kernel_params(params, image_hw=(32, 32)):
    """One-time fold of PyTorch-shaped params into kernel-ready operands."""
    h, w = image_hw
    kp = {}

    # conv1: just the Cout*Cin*2*2 scalars + biases (goes to SMEM).
    w1 = params["conv1_w"].astype(jnp.float32)            # (Co, Ci, 2, 2)
    b1 = params["conv1_b"].astype(jnp.float32)
    kp["c1"] = jnp.concatenate([w1.reshape(-1), b1.reshape(-1)])
    h, w = h // 2, w // 2
    c_out1 = w1.shape[0]
    prev_real = c_out1 * h * w
    assert prev_real % 128 == 0, "conv1 output width must be lane-dense"
    prev_pad = prev_real

    def pad2(m, rows, cols):
        return jnp.pad(m, ((0, rows - m.shape[0]), (0, cols - m.shape[1])))

    # conv2..conv4 folded into dense block matrices, zero-padded to >=128 lanes
    # (padded activation lanes stay 0 through ReLU; padded weight rows are 0,
    # so results are exact).
    for i in (2, 3, 4):
        m, (h, w) = _conv_s2_as_dense(params[f"conv{i}_w"], h, w)
        out_real = m.shape[1]
        out_pad = max(128, _round_up(out_real, 128))
        kp[f"m{i}"] = pad2(m, prev_pad, out_pad).astype(jnp.bfloat16)
        b = jnp.repeat(params[f"conv{i}_b"], h * w)
        kp[f"b{i}"] = jnp.pad(b, (0, out_pad - out_real)
                              ).reshape(1, -1).astype(jnp.float32)
        prev_real, prev_pad = out_real, out_pad

    # fc1
    w5 = params["fc1_w"].T                                # (conv_out, 128)
    d5 = max(128, _round_up(w5.shape[1], 128))
    kp["w5"] = pad2(w5, prev_pad, d5).astype(jnp.bfloat16)
    kp["b5"] = jnp.pad(params["fc1_b"], (0, d5 - w5.shape[1])
                       ).reshape(1, -1).astype(jnp.float32)

    # fc2: pad output lanes to 128; padded bias lanes are -1e30 so padded
    # logits vanish inside the fused log_softmax.
    w6 = params["fc2_w"].T                                # (128, out_dim)
    out_dim = w6.shape[1]
    d6 = max(128, _round_up(out_dim, 128))
    kp["w6"] = pad2(w6, d5, d6).astype(jnp.bfloat16)
    b6 = jnp.full((d6,), -1e30, jnp.float32).at[:out_dim].set(
        params["fc2_b"].astype(jnp.float32))
    kp["b6"] = b6.reshape(1, -1)
    return kp


# ------------------------------- forward pass -------------------------------

def _pick_batch_tile(batch):
    """Batch tile: multiple of 8 sublanes, capped at 512 rows, and chosen so
    that any batch >= 16 produces >= 2 grid steps (both v7x TensorCores)."""
    if batch <= 16:
        return 8
    half = (batch + 1) // 2
    return min(512, _round_up(half, 8))


def classifier_forward(kernel_params, x, output_dim=10):
    """x: (B, image_channels, 32, 32) float32 NCHW. Returns (B, output_dim)."""
    kp = kernel_params
    B, c_in, H, W = x.shape
    ho, wo = H // 2, W // 2
    hw1 = ho * wo
    c_out1 = kp["c1"].shape[0] // (4 * c_in + 1)
    d_in = c_in * 4 * hw1
    assert c_out1 * hw1 == kp["m2"].shape[0], "input size mismatch with params"

    # Space-to-depth to tap-major layout fused with the bf16 cast: one XLA
    # pass over x; the kernel then streams half the bytes from HBM.
    xt = x.reshape(B, c_in, ho, 2, wo, 2)
    xt = xt.transpose(0, 1, 3, 5, 2, 4)          # (B, ci, kh, kw, ho, wo)
    xt = xt.reshape(B, d_in).astype(jnp.bfloat16)

    tb = _pick_batch_tile(B)
    b_pad = _round_up(B, tb)
    if b_pad != B:
        xt = jnp.pad(xt, ((0, b_pad - B), (0, 0)))
    grid = (b_pad // tb,)
    n_out = kp["b6"].shape[-1]                   # 128 (lane-padded)

    weights = (kp["m2"], kp["b2"], kp["m3"], kp["b3"], kp["m4"], kp["b4"],
               kp["w5"], kp["b5"], kp["w6"], kp["b6"])
    # Constant block index -> each weight is DMA'd into VMEM a single time.
    # (pl.Buffered(1) would save <0.2 MiB here; omitted for portability.)
    w_specs = [pl.BlockSpec(w.shape, lambda i: (0, 0)) for w in weights]

    kernel = functools.partial(_fused_classifier_kernel,
                               conv1_out_ch=c_out1, conv1_in_ch=c_in,
                               conv1_hw=hw1)

    mats = (kp["m2"], kp["m3"], kp["m4"], kp["w5"], kp["w6"])
    flops = 2 * b_pad * (sum(int(m.shape[0]) * int(m.shape[1]) for m in mats)
                         + c_out1 * c_in * 4 * hw1)
    bytes_accessed = (int(xt.size) * 2 + b_pad * n_out * 4
                      + sum(int(w.size) * w.dtype.itemsize for w in weights)
                      + int(kp["c1"].size) * 4)
    cost = pl.CostEstimate(flops=int(flops),
                           transcendentals=int(b_pad * (n_out + 1)),
                           bytes_accessed=int(bytes_accessed))

    out = pl.pallas_call(
        kernel,
        out_shape=jax.ShapeDtypeStruct((b_pad, n_out), jnp.float32),
        grid_spec=pltpu.PrefetchScalarGridSpec(
            num_scalar_prefetch=0,
            grid=grid,
            in_specs=[pl.BlockSpec((tb, d_in), lambda i: (i, 0)),
                      pl.BlockSpec(memory_space=pltpu.MemorySpace.SMEM)]
                     + w_specs,
            out_specs=pl.BlockSpec((tb, n_out), lambda i: (i, 0)),
        ),
        compiler_params=pltpu.CompilerParams(
            dimension_semantics=("parallel",),
            vmem_limit_bytes=32 * 1024 * 1024,
        ),
        cost_estimate=cost,
    )(xt, kp["c1"], *weights)

    return out[:B, :output_dim]


# --------------------------- pure-XLA reference ------------------------------

def reference_forward(params, x):
    """Reference implementation of the original PyTorch forward (no Pallas)."""
    def conv(h, w, b):
        y = jax.lax.conv_general_dilated(
            h, w, window_strides=(2, 2), padding="VALID",
            dimension_numbers=("NCHW", "OIHW", "NCHW"))
        return jax.nn.relu(y + b[None, :, None, None])

    h = conv(x, params["conv1_w"], params["conv1_b"])
    h = conv(h, params["conv2_w"], params["conv2_b"])
    h = conv(h, params["conv3_w"], params["conv3_b"])
    h = conv(h, params["conv4_w"], params["conv4_b"])
    h = h.reshape(h.shape[0], -1)
    h = jax.nn.relu(h @ params["fc1_w"].T + params["fc1_b"])
    h = h @ params["fc2_w"].T + params["fc2_b"]
    return jax.nn.log_softmax(h, axis=-1)


# ----------------------------------- main ------------------------------------

if __name__ == "__main__":
    key = jax.random.PRNGKey(0)
    pkey, xkey = jax.random.split(key)

    params = init_params(pkey)                                 # PyTorch-shaped
    kparams = prepare_kernel_params(params, image_hw=(32, 32)) # fold once

    x = jax.random.normal(xkey, (2, 1, 32, 32), dtype=jnp.float32)

    out = jax.jit(classifier_forward)(kparams, x)
    out = jax.block_until_ready(out)

    assert out.shape == (2, 10)
    # rows of log_softmax should exponentiate-sum to ~1
    assert jnp.allclose(jnp.sum(jnp.exp(out), axis=1), 1.0, atol=1e-4)
    # matches the pure-XLA f32 reference (bf16 pipeline, f32 accumulation)
    ref = reference_forward(params, x)
    assert jnp.allclose(out, ref, atol=5e-2, rtol=5e-2), float(
        jnp.max(jnp.abs(out - ref)))
    print("KERNEL_OK")
</pallas_src>

<mosaic_0001>
module attributes {stable_mosaic.version = 11 : i64} {
  func.func @_fused_classifier_kernel(%arg0: i32, %arg1: memref<8x1024xbf16, #tpu.memory_space<vmem>>, %arg2: memref<5xf32, #tpu.memory_space<smem>>, %arg3: memref<256x128xbf16, #tpu.memory_space<vmem>>, %arg4: memref<1x128xf32, #tpu.memory_space<vmem>>, %arg5: memref<128x128xbf16, #tpu.memory_space<vmem>>, %arg6: memref<1x128xf32, #tpu.memory_space<vmem>>, %arg7: memref<128x128xbf16, #tpu.memory_space<vmem>>, %arg8: memref<1x128xf32, #tpu.memory_space<vmem>>, %arg9: memref<128x128xbf16, #tpu.memory_space<vmem>>, %arg10: memref<1x128xf32, #tpu.memory_space<vmem>>, %arg11: memref<128x128xbf16, #tpu.memory_space<vmem>>, %arg12: memref<1x128xf32, #tpu.memory_space<vmem>>, %arg13: memref<8x128xf32, #tpu.memory_space<vmem>>) attributes {dimension_semantics = [#tpu.dimension_semantics<parallel>], iteration_bounds = array<i64: 1>, scalar_prefetch = 0 : i64, scratch_operands = 0 : i64, tpu.core_type = #tpu.core_type<tc>, window_params = [{transform_indices = @transform_0, window_bounds = array<i64: 8, 1024>}, {transform_indices = @transform_1, window_bounds = array<i64: 5>}, {pipeline_mode = #tpu.pipeline_mode<synchronous>, transform_indices = @transform_2, window_bounds = array<i64: 256, 128>}, {pipeline_mode = #tpu.pipeline_mode<synchronous>, transform_indices = @transform_3, window_bounds = array<i64: 1, 128>}, {pipeline_mode = #tpu.pipeline_mode<synchronous>, transform_indices = @transform_4, window_bounds = array<i64: 128, 128>}, {pipeline_mode = #tpu.pipeline_mode<synchronous>, transform_indices = @transform_5, window_bounds = array<i64: 1, 128>}, {pipeline_mode = #tpu.pipeline_mode<synchronous>, transform_indices = @transform_6, window_bounds = array<i64: 128, 128>}, {pipeline_mode = #tpu.pipeline_mode<synchronous>, transform_indices = @transform_7, window_bounds = array<i64: 1, 128>}, {pipeline_mode = #tpu.pipeline_mode<synchronous>, transform_indices = @transform_8, window_bounds = array<i64: 128, 128>}, {pipeline_mode = #tpu.pipeline_mode<synchronous>, transform_indices = @transform_9, window_bounds = array<i64: 1, 128>}, {pipeline_mode = #tpu.pipeline_mode<synchronous>, transform_indices = @transform_10, window_bounds = array<i64: 128, 128>}, {pipeline_mode = #tpu.pipeline_mode<synchronous>, transform_indices = @transform_11, window_bounds = array<i64: 1, 128>}, {transform_indices = @transform_12, window_bounds = array<i64: 8, 128>}]} {
    %c0 = arith.constant 0 : index
    %c0_0 = arith.constant 0 : index
    %0 = vector.load %arg1[%c0, %c0_0] : memref<8x1024xbf16, #tpu.memory_space<vmem>>, vector<8x1024xbf16>
    %cst = arith.constant 0.000000e+00 : f32
    %1 = vector.broadcast %cst : f32 to vector<8x256xf32>
    %2 = vector.extract_strided_slice %0 {offsets = [0, 0], sizes = [8, 256], strides = [1, 1]} : vector<8x1024xbf16> to vector<8x256xbf16>
    %c0_1 = arith.constant 0 : index
    %3 = memref.load %arg2[%c0_1] : memref<5xf32, #tpu.memory_space<smem>>
    %4 = arith.extf %2 : vector<8x256xbf16> to vector<8x256xf32>
    %5 = vector.broadcast %3 : f32 to vector<8x256xf32>
    %6 = arith.mulf %5, %4 : vector<8x256xf32>
    %7 = arith.addf %1, %6 : vector<8x256xf32>
    %8 = vector.extract_strided_slice %0 {offsets = [0, 256], sizes = [8, 256], strides = [1, 1]} : vector<8x1024xbf16> to vector<8x256xbf16>
    %c1 = arith.constant 1 : index
    %9 = memref.load %arg2[%c1] : memref<5xf32, #tpu.memory_space<smem>>
    %10 = arith.extf %8 : vector<8x256xbf16> to vector<8x256xf32>
    %11 = vector.broadcast %9 : f32 to vector<8x256xf32>
    %12 = arith.mulf %11, %10 : vector<8x256xf32>
    %13 = arith.addf %7, %12 : vector<8x256xf32>
    %14 = vector.extract_strided_slice %0 {offsets = [0, 512], sizes = [8, 256], strides = [1, 1]} : vector<8x1024xbf16> to vector<8x256xbf16>
    %c2 = arith.constant 2 : index
    %15 = memref.load %arg2[%c2] : memref<5xf32, #tpu.memory_space<smem>>
    %16 = arith.extf %14 : vector<8x256xbf16> to vector<8x256xf32>
    %17 = vector.broadcast %15 : f32 to vector<8x256xf32>
    %18 = arith.mulf %17, %16 : vector<8x256xf32>
    %19 = arith.addf %13, %18 : vector<8x256xf32>
    %20 = vector.extract_strided_slice %0 {offsets = [0, 768], sizes = [8, 256], strides = [1, 1]} : vector<8x1024xbf16> to vector<8x256xbf16>
    %c3 = arith.constant 3 : index
    %21 = memref.load %arg2[%c3] : memref<5xf32, #tpu.memory_space<smem>>
    %22 = arith.extf %20 : vector<8x256xbf16> to vector<8x256xf32>
    %23 = vector.broadcast %21 : f32 to vector<8x256xf32>
    %24 = arith.mulf %23, %22 : vector<8x256xf32>
    %25 = arith.addf %19, %24 : vector<8x256xf32>
    %c4 = arith.constant 4 : index
    %26 = memref.load %arg2[%c4] : memref<5xf32, #tpu.memory_space<smem>>
    %27 = vector.broadcast %26 : f32 to vector<8x256xf32>
    %28 = arith.addf %25, %27 : vector<8x256xf32>
    %cst_2 = arith.constant 0.000000e+00 : f32
    %29 = vector.broadcast %cst_2 : f32 to vector<8x256xf32>
    %30 = arith.maximumf %28, %29 : vector<8x256xf32>
    %31 = arith.truncf %30 : vector<8x256xf32> to vector<8x256xbf16>
    %c0_3 = arith.constant 0 : index
    %c0_4 = arith.constant 0 : index
    %32 = vector.load %arg3[%c0_3, %c0_4] : memref<256x128xbf16, #tpu.memory_space<vmem>>, vector<256x128xbf16>
    %cst_5 = arith.constant dense<0.000000e+00> : vector<8x128xf32>
    %33 = tpu.matmul %31, %32, %cst_5 {dimension_numbers = #tpu.dot_dimension_numbers<[1], [0], [0], [1], [0, 0, 1, 1], [], []>} : vector<8x256xbf16>, vector<256x128xbf16>, vector<8x128xf32> -> vector<8x128xf32>
    %c0_6 = arith.constant 0 : index
    %c0_7 = arith.constant 0 : index
    %34 = vector.load %arg4[%c0_6, %c0_7] : memref<1x128xf32, #tpu.memory_space<vmem>>, vector<1x128xf32>
    %35 = vector.broadcast %34 : vector<1x128xf32> to vector<8x128xf32>
    %36 = arith.addf %33, %35 : vector<8x128xf32>
    %cst_8 = arith.constant 0.000000e+00 : f32
    %37 = vector.broadcast %cst_8 : f32 to vector<8x128xf32>
    %38 = arith.maximumf %36, %37 : vector<8x128xf32>
    %39 = arith.truncf %38 : vector<8x128xf32> to vector<8x128xbf16>
    %c0_9 = arith.constant 0 : index
    %c0_10 = arith.constant 0 : index
    %40 = vector.load %arg5[%c0_9, %c0_10] : memref<128x128xbf16, #tpu.memory_space<vmem>>, vector<128x128xbf16>
    %cst_11 = arith.constant dense<0.000000e+00> : vector<8x128xf32>
    %41 = tpu.matmul %39, %40, %cst_11 {dimension_numbers = #tpu.dot_dimension_numbers<[1], [0], [0], [1], [0, 0, 1, 1], [], []>} : vector<8x128xbf16>, vector<128x128xbf16>, vector<8x128xf32> -> vector<8x128xf32>
    %c0_12 = arith.constant 0 : index
    %c0_13 = arith.constant 0 : index
    %42 = vector.load %arg6[%c0_12, %c0_13] : memref<1x128xf32, #tpu.memory_space<vmem>>, vector<1x128xf32>
    %43 = vector.broadcast %42 : vector<1x128xf32> to vector<8x128xf32>
    %44 = arith.addf %41, %43 : vector<8x128xf32>
    %cst_14 = arith.constant 0.000000e+00 : f32
    %45 = vector.broadcast %cst_14 : f32 to vector<8x128xf32>
    %46 = arith.maximumf %44, %45 : vector<8x128xf32>
    %47 = arith.truncf %46 : vector<8x128xf32> to vector<8x128xbf16>
    %c0_15 = arith.constant 0 : index
    %c0_16 = arith.constant 0 : index
    %48 = vector.load %arg7[%c0_15, %c0_16] : memref<128x128xbf16, #tpu.memory_space<vmem>>, vector<128x128xbf16>
    %cst_17 = arith.constant dense<0.000000e+00> : vector<8x128xf32>
    %49 = tpu.matmul %47, %48, %cst_17 {dimension_numbers = #tpu.dot_dimension_numbers<[1], [0], [0], [1], [0, 0, 1, 1], [], []>} : vector<8x128xbf16>, vector<128x128xbf16>, vector<8x128xf32> -> vector<8x128xf32>
    %c0_18 = arith.constant 0 : index
    %c0_19 = arith.constant 0 : index
    %50 = vector.load %arg8[%c0_18, %c0_19] : memref<1x128xf32, #tpu.memory_space<vmem>>, vector<1x128xf32>
    %51 = vector.broadcast %50 : vector<1x128xf32> to vector<8x128xf32>
    %52 = arith.addf %49, %51 : vector<8x128xf32>
    %cst_20 = arith.constant 0.000000e+00 : f32
    %53 = vector.broadcast %cst_20 : f32 to vector<8x128xf32>
    %54 = arith.maximumf %52, %53 : vector<8x128xf32>
    %55 = arith.truncf %54 : vector<8x128xf32> to vector<8x128xbf16>
    %c0_21 = arith.constant 0 : index
    %c0_22 = arith.constant 0 : index
    %56 = vector.load %arg9[%c0_21, %c0_22] : memref<128x128xbf16, #tpu.memory_space<vmem>>, vector<128x128xbf16>
    %cst_23 = arith.constant dense<0.000000e+00> : vector<8x128xf32>
    %57 = tpu.matmul %55, %56, %cst_23 {dimension_numbers = #tpu.dot_dimension_numbers<[1], [0], [0], [1], [0, 0, 1, 1], [], []>} : vector<8x128xbf16>, vector<128x128xbf16>, vector<8x128xf32> -> vector<8x128xf32>
    %c0_24 = arith.constant 0 : index
    %c0_25 = arith.constant 0 : index
    %58 = vector.load %arg10[%c0_24, %c0_25] : memref<1x128xf32, #tpu.memory_space<vmem>>, vector<1x128xf32>
    %59 = vector.broadcast %58 : vector<1x128xf32> to vector<8x128xf32>
    %60 = arith.addf %57, %59 : vector<8x128xf32>
    %cst_26 = arith.constant 0.000000e+00 : f32
    %61 = vector.broadcast %cst_26 : f32 to vector<8x128xf32>
    %62 = arith.maximumf %60, %61 : vector<8x128xf32>
    %63 = arith.truncf %62 : vector<8x128xf32> to vector<8x128xbf16>
    %c0_27 = arith.constant 0 : index
    %c0_28 = arith.constant 0 : index
    %64 = vector.load %arg11[%c0_27, %c0_28] : memref<128x128xbf16, #tpu.memory_space<vmem>>, vector<128x128xbf16>
    %cst_29 = arith.constant dense<0.000000e+00> : vector<8x128xf32>
    %65 = tpu.matmul %63, %64, %cst_29 {dimension_numbers = #tpu.dot_dimension_numbers<[1], [0], [0], [1], [0, 0, 1, 1], [], []>} : vector<8x128xbf16>, vector<128x128xbf16>, vector<8x128xf32> -> vector<8x128xf32>
    %c0_30 = arith.constant 0 : index
    %c0_31 = arith.constant 0 : index
    %66 = vector.load %arg12[%c0_30, %c0_31] : memref<1x128xf32, #tpu.memory_space<vmem>>, vector<1x128xf32>
    %67 = vector.broadcast %66 : vector<1x128xf32> to vector<8x128xf32>
    %68 = arith.addf %65, %67 : vector<8x128xf32>
    %cst_32 = arith.constant dense<0xFF800000> : vector<8xf32>
    %69 = vector.multi_reduction <maximumf>, %68, %cst_32 [1] : vector<8x128xf32> to vector<8xf32>
    %70 = vector.shape_cast %69 : vector<8xf32> to vector<8x1xf32>
    %71 = vector.broadcast %70 : vector<8x1xf32> to vector<8x128xf32>
    %72 = arith.subf %68, %71 : vector<8x128xf32>
    %73 = math.exp %72 : vector<8x128xf32>
    %cst_33 = arith.constant dense<0.000000e+00> : vector<8xf32>
    %74 = vector.multi_reduction <add>, %73, %cst_33 [1] : vector<8x128xf32> to vector<8xf32>
    %75 = vector.shape_cast %74 : vector<8xf32> to vector<8x1xf32>
    %76 = math.log %75 : vector<8x1xf32>
    %77 = vector.broadcast %70 : vector<8x1xf32> to vector<8x128xf32>
    %78 = arith.subf %68, %77 : vector<8x128xf32>
    %79 = vector.broadcast %76 : vector<8x1xf32> to vector<8x128xf32>
    %80 = arith.subf %78, %79 : vector<8x128xf32>
    %c0_34 = arith.constant 0 : index
    %c0_35 = arith.constant 0 : index
    %81 = vector.load %arg13[%c0_34, %c0_35] : memref<8x128xf32, #tpu.memory_space<vmem>>, vector<8x128xf32>
    tpu.vector_store %arg13[%c0_34, %c0_35], %80 {strides = array<i32>} : memref<8x128xf32, #tpu.memory_space<vmem>>, vector<8x128xf32>,
    return
  }
  func.func @transform_0(%arg0: i32) -> (i32, i32) {
    %c0_i32 = arith.constant 0 : i32
    %c0_i32_0 = arith.constant 0 : i32
    return %arg0, %c0_i32 : i32, i32
  }
  func.func @transform_1(%arg0: i32) -> i32 {
    %c0_i32 = arith.constant 0 : i32
    %c0_i32_0 = arith.constant 0 : i32
    return %c0_i32 : i32
  }
  func.func @transform_2(%arg0: i32) -> (i32, i32) {
    %c0_i32 = arith.constant 0 : i32
    %c0_i32_0 = arith.constant 0 : i32
    %c0_i32_1 = arith.constant 0 : i32
    return %c0_i32, %c0_i32_0 : i32, i32
  }
  func.func @transform_3(%arg0: i32) -> (i32, i32) {
    %c0_i32 = arith.constant 0 : i32
    %c0_i32_0 = arith.constant 0 : i32
    %c0_i32_1 = arith.constant 0 : i32
    return %c0_i32, %c0_i32_0 : i32, i32
  }
  func.func @transform_4(%arg0: i32) -> (i32, i32) {
    %c0_i32 = arith.constant 0 : i32
    %c0_i32_0 = arith.constant 0 : i32
    %c0_i32_1 = arith.constant 0 : i32
    return %c0_i32, %c0_i32_0 : i32, i32
  }
  func.func @transform_5(%arg0: i32) -> (i32, i32) {
    %c0_i32 = arith.constant 0 : i32
    %c0_i32_0 = arith.constant 0 : i32
    %c0_i32_1 = arith.constant 0 : i32
    return %c0_i32, %c0_i32_0 : i32, i32
  }
  func.func @transform_6(%arg0: i32) -> (i32, i32) {
    %c0_i32 = arith.constant 0 : i32
    %c0_i32_0 = arith.constant 0 : i32
    %c0_i32_1 = arith.constant 0 : i32
    return %c0_i32, %c0_i32_0 : i32, i32
  }
  func.func @transform_7(%arg0: i32) -> (i32, i32) {
    %c0_i32 = arith.constant 0 : i32
    %c0_i32_0 = arith.constant 0 : i32
    %c0_i32_1 = arith.constant 0 : i32
    return %c0_i32, %c0_i32_0 : i32, i32
  }
  func.func @transform_8(%arg0: i32) -> (i32, i32) {
    %c0_i32 = arith.constant 0 : i32
    %c0_i32_0 = arith.constant 0 : i32
    %c0_i32_1 = arith.constant 0 : i32
    return %c0_i32, %c0_i32_0 : i32, i32
  }
  func.func @transform_9(%arg0: i32) -> (i32, i32) {
    %c0_i32 = arith.constant 0 : i32
    %c0_i32_0 = arith.constant 0 : i32
    %c0_i32_1 = arith.constant 0 : i32
    return %c0_i32, %c0_i32_0 : i32, i32
  }
  func.func @transform_10(%arg0: i32) -> (i32, i32) {
    %c0_i32 = arith.constant 0 : i32
    %c0_i32_0 = arith.constant 0 : i32
    %c0_i32_1 = arith.constant 0 : i32
    return %c0_i32, %c0_i32_0 : i32, i32
  }
  func.func @transform_11(%arg0: i32) -> (i32, i32) {
    %c0_i32 = arith.constant 0 : i32
    %c0_i32_0 = arith.constant 0 : i32
    %c0_i32_1 = arith.constant 0 : i32
    return %c0_i32, %c0_i32_0 : i32, i32
  }
  func.func @transform_12(%arg0: i32) -> (i32, i32) {
    %c0_i32 = arith.constant 0 : i32
    %c0_i32_0 = arith.constant 0 : i32
    return %arg0, %c0_i32 : i32, i32
  }
}

</mosaic_0001>

<llo_original>
// kernel: classifier_forward.1
$region0: #{classifier_forward.1}
  #allocation0 [shape = 'u32[]', space=smem, size = 0x4, offset = 0x4, fixed_abs, tag = 'smem constant byte address 0x4 - core index']
  #allocation1 [shape = 'u32[72,128]{1,0:T(1,128)}', space=vmem, size = 0x9000, scoped, tag = 'internal scratch']
  %s0 = inlined_call_operand.vmem [shape: bf16[8,1024], index: 0, kind: input, shape index: {}]
  %s1 = inlined_call_operand.vmem [shape: f32[5], index: 1, kind: input, shape index: {}]
  %s2 = inlined_call_operand.vmem [shape: bf16[256,128], index: 2, kind: input, shape index: {}]
  %s3 = inlined_call_operand.vmem [shape: f32[1,128], index: 3, kind: input, shape index: {}]
  %s4 = inlined_call_operand.vmem [shape: bf16[128,128], index: 4, kind: input, shape index: {}]
  %s5 = inlined_call_operand.vmem [shape: f32[1,128], index: 5, kind: input, shape index: {}]
  %s6 = inlined_call_operand.vmem [shape: bf16[128,128], index: 6, kind: input, shape index: {}]
  %s7 = inlined_call_operand.vmem [shape: f32[1,128], index: 7, kind: input, shape index: {}]
  %s8 = inlined_call_operand.vmem [shape: bf16[128,128], index: 8, kind: input, shape index: {}]
  %s9 = inlined_call_operand.vmem [shape: f32[1,128], index: 9, kind: input, shape index: {}]
  %s10 = inlined_call_operand.vmem [shape: bf16[128,128], index: 10, kind: input, shape index: {}]
  %s11 = inlined_call_operand.vmem [shape: f32[1,128], index: 11, kind: input, shape index: {}]
  %s12 = inlined_call_operand.vmem [shape: f32[8,128], index: 12, kind: output, shape index: {}]
  %s13 = sld [smem:[#allocation0]]
  $region62: #{classifier_forward.1} parent=0
    _
  %s15 = ssub.s32 1, %s13
  %s16 = scalar_select 0, %s15, %s13
  $region1: #{classifier_forward.1} parent=0
    #allocation2 [shape = 'u8[512]{0}', space=smem, size = 0x200, scoped, tag = 'input window, operand 1, single buffered']
    #allocation3 [shape = 's32[1]{0}', space=sflag, size = 0x4, scoped, tag = 'scoped memory for classifier_forward.1']
    %17 = vsyncpa [#allocation3], 0
    // Predicated region
    $region2: #{classifier_forward.1} parent=1 // pred_check
      _
    $region3: #{classifier_forward.1} parent=1 // pred_check_branch
      %19 = sbr.rel (0) target = $region5
    $region4: #{classifier_forward.1} parent=1 // pred_region
      _
    $region5: #{classifier_forward.1} parent=1 // pred_fallthru
      _
    // Predicated region
    $region6: #{classifier_forward.1} parent=1 // pred_check
      _
    $region7: #{classifier_forward.1} parent=1 // pred_check_branch
      %21 = sbr.rel (0) target = $region9
    $region8: #{classifier_forward.1} parent=1 // pred_region
      %23 = vsyncadd [#allocation3], 0
      %s25 = sshll.u32 %s1, 4
      %s26 = int_to_ptr.vmem [resolvable:$true] %s25
      %28 = dma.vmem_to_smem %s26, 16, [#allocation2], [#allocation3]
    $region9: #{classifier_forward.1} parent=1 // pred_fallthru
      _
    // Predicated region
    $region10: #{classifier_forward.1} parent=1 // pred_check
      _
    $region11: #{classifier_forward.1} parent=1 // pred_check_branch
      %30 = sbr.rel (0) target = $region13
    $region12: #{classifier_forward.1} parent=1 // pred_region
      _
    $region13: #{classifier_forward.1} parent=1 // pred_fallthru
      _
    // Predicated region
    $region14: #{classifier_forward.1} parent=1 // pred_check
      _
    $region15: #{classifier_forward.1} parent=1 // pred_check_branch
      %32 = sbr.rel (0) target = $region17
    $region16: #{classifier_forward.1} parent=1 // pred_region
      _
    $region17: #{classifier_forward.1} parent=1 // pred_fallthru
      _
    // Predicated region
    $region18: #{classifier_forward.1} parent=1 // pred_check
      _
    $region19: #{classifier_forward.1} parent=1 // pred_check_branch
      %34 = sbr.rel (0) target = $region21
    $region20: #{classifier_forward.1} parent=1 // pred_region
      _
    $region21: #{classifier_forward.1} parent=1 // pred_fallthru
      _
    // Predicated region
    $region22: #{classifier_forward.1} parent=1 // pred_check
      _
    $region23: #{classifier_forward.1} parent=1 // pred_check_branch
      %36 = sbr.rel (0) target = $region25
    $region24: #{classifier_forward.1} parent=1 // pred_region
      _
    $region25: #{classifier_forward.1} parent=1 // pred_fallthru
      _
    // Predicated region
    $region26: #{classifier_forward.1} parent=1 // pred_check
      _
    $region27: #{classifier_forward.1} parent=1 // pred_check_branch
      %38 = sbr.rel (0) target = $region29
    $region28: #{classifier_forward.1} parent=1 // pred_region
      _
    $region29: #{classifier_forward.1} parent=1 // pred_fallthru
      _
    // Predicated region
    $region30: #{classifier_forward.1} parent=1 // pred_check
      _
    $region31: #{classifier_forward.1} parent=1 // pred_check_branch
      %40 = sbr.rel (0) target = $region33
    $region32: #{classifier_forward.1} parent=1 // pred_region
      _
    $region33: #{classifier_forward.1} parent=1 // pred_fallthru
      _
    // Predicated region
    $region34: #{classifier_forward.1} parent=1 // pred_check
      _
    $region35: #{classifier_forward.1} parent=1 // pred_check_branch
      %42 = sbr.rel (0) target = $region37
    $region36: #{classifier_forward.1} parent=1 // pred_region
      _
    $region37: #{classifier_forward.1} parent=1 // pred_fallthru
      _
    // Predicated region
    $region38: #{classifier_forward.1} parent=1 // pred_check
      _
    $region39: #{classifier_forward.1} parent=1 // pred_check_branch
      %44 = sbr.rel (0) target = $region41
    $region40: #{classifier_forward.1} parent=1 // pred_region
      _
    $region41: #{classifier_forward.1} parent=1 // pred_fallthru
      _
    // Predicated region
    $region42: #{classifier_forward.1} parent=1 // pred_check
      _
    $region43: #{classifier_forward.1} parent=1 // pred_check_branch
      %46 = sbr.rel (0) target = $region45
    $region44: #{classifier_forward.1} parent=1 // pred_region
      _
    $region45: #{classifier_forward.1} parent=1 // pred_fallthru
      _
    // Predicated region
    $region46: #{classifier_forward.1} parent=1 // pred_check
      _
    $region47: #{classifier_forward.1} parent=1 // pred_check_branch
      %48 = sbr.rel (0) target = $region49
    $region48: #{classifier_forward.1} parent=1 // pred_region
      _
    $region49: #{classifier_forward.1} parent=1 // pred_fallthru
      _
    // Predicated region
    $region50: #{classifier_forward.1} parent=1 // pred_check
      _
    $region51: #{classifier_forward.1} parent=1 // pred_check_branch
      %50 = sbr.rel (0) target = $region53
    $region52: #{classifier_forward.1} parent=1 // pred_region
      %52 = dma.done [#allocation3], 16
    $region53: #{classifier_forward.1} parent=1 // pred_fallthru
      _
    %53 = sfence
    %v54 = vld [vmem:[%s0] sm:$0xff]
    %v55 = vld [vmem:[%s0 + $0x8] sm:$0xff]
    %v56 = vld [vmem:[%s0 + $0x10] sm:$0xff]
    %v57 = vld [vmem:[%s0 + $0x18] sm:$0xff]
    %s58 = sld [smem:[#allocation2]]
    %v59 = vunpack.c.l.bf16 %v54
    %v60 = vunpack.c.h.bf16 %v54
    %v61 = vstv %s58
    %v62 = vmul.f32 %v61, %v59
    %v63 = vmul.f32 %v61, %v60
    %v64 = vadd.f32 %v62, 0.0
    %v65 = vadd.f32 %v63, 0.0
    %s66 = sld [smem:[#allocation2 + $0x1]]
    %v67 = vunpack.c.l.bf16 %v55
    %v68 = vunpack.c.h.bf16 %v55
    %v69 = vstv %s66
    %v70 = vmul.f32 %v69, %v67
    %v71 = vmul.f32 %v69, %v68
    %v72 = vadd.f32 %v64, %v70
    %v73 = vadd.f32 %v65, %v71
    %s74 = sld [smem:[#allocation2 + $0x2]]
    %v75 = vunpack.c.l.bf16 %v56
    %v76 = vunpack.c.h.bf16 %v56
    %v77 = vstv %s74
    %v78 = vmul.f32 %v77, %v75
    %v79 = vmul.f32 %v77, %v76
    %v80 = vadd.f32 %v72, %v78
    %v81 = vadd.f32 %v73, %v79
    %s82 = sld [smem:[#allocation2 + $0x3]]
    %v83 = vunpack.c.l.bf16 %v57
    %v84 = vunpack.c.h.bf16 %v57
    %v85 = vstv %s82
    %v86 = vmul.f32 %v85, %v83
    %v87 = vmul.f32 %v85, %v84
    %v88 = vadd.f32 %v80, %v86
    %v89 = vadd.f32 %v81, %v87
    %s90 = sld [smem:[#allocation2 + $0x4]]
    %v91 = vstv %s90
    %v92 = vadd.f32 %v88, %v91
    %v93 = vadd.f32 %v89, %v91
    %v94 = vmax.f32 %v92, 0.0
    %v95 = vmax.f32 %v93, 0.0
    %v96 = vpack.c.bf16 %v94, %v94
    %v97 = vpack.c.bf16 %v95, %v95
    %v98 = vld [vmem:[%s2] sm:$0xf]
    %v99 = vld [vmem:[%s2 + $0x4] sm:$0xf]
    %v100 = vld [vmem:[%s2 + $0x8] sm:$0xf]
    %v101 = vld [vmem:[%s2 + $0xc] sm:$0xf]
    %v102 = vld [vmem:[%s2 + $0x10] sm:$0xf]
    %v103 = vld [vmem:[%s2 + $0x14] sm:$0xf]
    %v104 = vld [vmem:[%s2 + $0x18] sm:$0xf]
    %v105 = vld [vmem:[%s2 + $0x1c] sm:$0xf]
    %v106 = vld [vmem:[%s2 + $0x20] sm:$0xf]
    %v107 = vld [vmem:[%s2 + $0x24] sm:$0xf]
    %v108 = vld [vmem:[%s2 + $0x28] sm:$0xf]
    %v109 = vld [vmem:[%s2 + $0x2c] sm:$0xf]
    %v110 = vld [vmem:[%s2 + $0x30] sm:$0xf]
    %v111 = vld [vmem:[%s2 + $0x34] sm:$0xf]
    %v112 = vld [vmem:[%s2 + $0x38] sm:$0xf]
    %v113 = vld [vmem:[%s2 + $0x3c] sm:$0xf]
    %v114 = vld [vmem:[%s2 + $0x40] sm:$0xf]
    %v115 = vld [vmem:[%s2 + $0x44] sm:$0xf]
    %v116 = vld [vmem:[%s2 + $0x48] sm:$0xf]
    %v117 = vld [vmem:[%s2 + $0x4c] sm:$0xf]
    %v118 = vld [vmem:[%s2 + $0x50] sm:$0xf]
    %v119 = vld [vmem:[%s2 + $0x54] sm:$0xf]
    %v120 = vld [vmem:[%s2 + $0x58] sm:$0xf]
    %v121 = vld [vmem:[%s2 + $0x5c] sm:$0xf]
    %v122 = vld [vmem:[%s2 + $0x60] sm:$0xf]
    %v123 = vld [vmem:[%s2 + $0x64] sm:$0xf]
    %v124 = vld [vmem:[%s2 + $0x68] sm:$0xf]
    %v125 = vld [vmem:[%s2 + $0x6c] sm:$0xf]
    %v126 = vld [vmem:[%s2 + $0x70] sm:$0xf]
    %v127 = vld [vmem:[%s2 + $0x74] sm:$0xf]
    %v128 = vld [vmem:[%s2 + $0x78] sm:$0xf]
    %v129 = vld [vmem:[%s2 + $0x7c] sm:$0xf]
    %v130 = vld [vmem:[%s3] sm:$0x1]
    %v132 = vperm.slane %v130, 0
    %v166 = vunpack.c.l.b16 %v98
    %v167 = vunpack.c.l.b16 %v99
    %v168 = vunpack.c.l.b16 %v100
    %v169 = vunpack.c.l.b16 %v101
    %v170 = vunpack.c.l.b16 %v102
    %v171 = vunpack.c.l.b16 %v103
    %v172 = vunpack.c.l.b16 %v104
    %v173 = vunpack.c.l.b16 %v105
    %v174 = vunpack.c.l.b16 %v106
    %v175 = vunpack.c.l.b16 %v107
    %v176 = vunpack.c.l.b16 %v108
    %v177 = vunpack.c.l.b16 %v109
    %v178 = vunpack.c.l.b16 %v110
    %v179 = vunpack.c.l.b16 %v111
    %v180 = vunpack.c.l.b16 %v112
    %v181 = vunpack.c.l.b16 %v113
    %v182 = vunpack.c.l.b16 %v114
    %v183 = vunpack.c.l.b16 %v115
    %v184 = vunpack.c.l.b16 %v116
    %v185 = vunpack.c.l.b16 %v117
    %v186 = vunpack.c.l.b16 %v118
    %v187 = vunpack.c.l.b16 %v119
    %v188 = vunpack.c.l.b16 %v120
    %v189 = vunpack.c.l.b16 %v121
    %v190 = vunpack.c.l.b16 %v122
    %v191 = vunpack.c.l.b16 %v123
    %v192 = vunpack.c.l.b16 %v124
    %v193 = vunpack.c.l.b16 %v125
    %v194 = vunpack.c.l.b16 %v126
    %v195 = vunpack.c.l.b16 %v127
    %v196 = vunpack.c.l.b16 %v128
    %v197 = vunpack.c.l.b16 %v129
    %v198 = vpack.c.b16 %v167, %v166
    %v199 = vpack.c.b16 %v169, %v168
    %v200 = vpack.c.b16 %v171, %v170
    %v201 = vpack.c.b16 %v173, %v172
    %v202 = vpack.c.b16 %v175, %v174
    %v203 = vpack.c.b16 %v177, %v176
    %v204 = vpack.c.b16 %v179, %v178
    %v205 = vpack.c.b16 %v181, %v180
    %v206 = vpack.c.b16 %v183, %v182
    %v207 = vpack.c.b16 %v185, %v184
    %v208 = vpack.c.b16 %v187, %v186
    %v209 = vpack.c.b16 %v189, %v188
    %v210 = vpack.c.b16 %v191, %v190
    %v211 = vpack.c.b16 %v193, %v192
    %v212 = vpack.c.b16 %v195, %v194
    %v213 = vpack.c.b16 %v197, %v196
    %230 = vmatpush.bf16.msra.mxu0 %v205
    %231 = vmatpush.bf16.msra.mxu0 %v204
    %232 = vmatpush.bf16.msra.mxu0 %v203
    %233 = vmatpush.bf16.msra.mxu0 %v202
    %234 = vmatpush.bf16.msra.mxu0 %v201
    %235 = vmatpush.bf16.msra.mxu0 %v200
    %236 = vmatpush.bf16.msra.mxu0 %v199
    %237 = vmatpush.bf16.msra.mxu0 %v198
    %238 = vmatmul.bf16.gmra.mxu0 %v96
    %v239 = vpop.f32.mrf.mxu0
    %v240 = vadd.f32 %v132, %v239
    %v241 = vpop.f32.mrf.mxu0
    %242 = vdwg.mxu0
    %243 = vmatpush.bf16.msra.mxu0 %v213
    %244 = vmatpush.bf16.msra.mxu0 %v212
    %245 = vmatpush.bf16.msra.mxu0 %v211
    %246 = vmatpush.bf16.msra.mxu0 %v210
    %247 = vmatpush.bf16.msra.mxu0 %v209
    %248 = vmatpush.bf16.msra.mxu0 %v208
    %249 = vmatpush.bf16.msra.mxu0 %v207
    %250 = vmatpush.bf16.msra.mxu0 %v206
    %251 = vmatmul.bf16.gmra.mxu0 %v97
    %v252 = vpop.f32.mrf.mxu0
    %v253 = vadd.f32 %v240, %v252
    %v254 = vpop.f32.mrf.mxu0
    %255 = vdwg.mxu0
    %v256 = vmax.f32 %v253, 0.0
    %v257 = vpack.c.bf16 %v256, %v256
    %v258 = vld [vmem:[%s4] sm:$0xf]
    %v259 = vld [vmem:[%s4 + $0x4] sm:$0xf]
    %v260 = vld [vmem:[%s4 + $0x8] sm:$0xf]
    %v261 = vld [vmem:[%s4 + $0xc] sm:$0xf]
    %v262 = vld [vmem:[%s4 + $0x10] sm:$0xf]
    %v263 = vld [vmem:[%s4 + $0x14] sm:$0xf]
    %v264 = vld [vmem:[%s4 + $0x18] sm:$0xf]
    %v265 = vld [vmem:[%s4 + $0x1c] sm:$0xf]
    %v266 = vld [vmem:[%s4 + $0x20] sm:$0xf]
    %v267 = vld [vmem:[%s4 + $0x24] sm:$0xf]
    %v268 = vld [vmem:[%s4 + $0x28] sm:$0xf]
    %v269 = vld [vmem:[%s4 + $0x2c] sm:$0xf]
    %v270 = vld [vmem:[%s4 + $0x30] sm:$0xf]
    %v271 = vld [vmem:[%s4 + $0x34] sm:$0xf]
    %v272 = vld [vmem:[%s4 + $0x38] sm:$0xf]
    %v273 = vld [vmem:[%s4 + $0x3c] sm:$0xf]
    %v274 = vld [vmem:[%s5] sm:$0x1]
    %v276 = vperm.slane %v274, 0
    %v294 = vunpack.c.l.b16 %v258
    %v295 = vunpack.c.l.b16 %v259
    %v296 = vunpack.c.l.b16 %v260
    %v297 = vunpack.c.l.b16 %v261
    %v298 = vunpack.c.l.b16 %v262
    %v299 = vunpack.c.l.b16 %v263
    %v300 = vunpack.c.l.b16 %v264
    %v301 = vunpack.c.l.b16 %v265
    %v302 = vunpack.c.l.b16 %v266
    %v303 = vunpack.c.l.b16 %v267
    %v304 = vunpack.c.l.b16 %v268
    %v305 = vunpack.c.l.b16 %v269
    %v306 = vunpack.c.l.b16 %v270
    %v307 = vunpack.c.l.b16 %v271
    %v308 = vunpack.c.l.b16 %v272
    %v309 = vunpack.c.l.b16 %v273
    %v310 = vpack.c.b16 %v295, %v294
    %v311 = vpack.c.b16 %v297, %v296
    %v312 = vpack.c.b16 %v299, %v298
    %v313 = vpack.c.b16 %v301, %v300
    %v314 = vpack.c.b16 %v303, %v302
    %v315 = vpack.c.b16 %v305, %v304
    %v316 = vpack.c.b16 %v307, %v306
    %v317 = vpack.c.b16 %v309, %v308
    %326 = vmatpush.bf16.msra.mxu0 %v317
    %327 = vmatpush.bf16.msra.mxu0 %v316
    %328 = vmatpush.bf16.msra.mxu0 %v315
    %329 = vmatpush.bf16.msra.mxu0 %v314
    %330 = vmatpush.bf16.msra.mxu0 %v313
    %331 = vmatpush.bf16.msra.mxu0 %v312
    %332 = vmatpush.bf16.msra.mxu0 %v311
    %333 = vmatpush.bf16.msra.mxu0 %v310
    %334 = vmatmul.bf16.gmra.mxu0 %v257
    %v335 = vpop.f32.mrf.mxu0
    %v336 = vadd.f32 %v276, %v335
    %v337 = vpop.f32.mrf.mxu0
    %338 = vdwg.mxu0
    %v339 = vmax.f32 %v336, 0.0
    %v340 = vpack.c.bf16 %v339, %v339
    %v341 = vld [vmem:[%s6] sm:$0xf]
    %v342 = vld [vmem:[%s6 + $0x4] sm:$0xf]
    %v343 = vld [vmem:[%s6 + $0x8] sm:$0xf]
    %v344 = vld [vmem:[%s6 + $0xc] sm:$0xf]
    %v345 = vld [vmem:[%s6 + $0x10] sm:$0xf]
    %v346 = vld [vmem:[%s6 + $0x14] sm:$0xf]
    %v347 = vld [vmem:[%s6 + $0x18] sm:$0xf]
    %v348 = vld [vmem:[%s6 + $0x1c] sm:$0xf]
    %v349 = vld [vmem:[%s6 + $0x20] sm:$0xf]
    %v350 = vld [vmem:[%s6 + $0x24] sm:$0xf]
    %v351 = vld [vmem:[%s6 + $0x28] sm:$0xf]
    %v352 = vld [vmem:[%s6 + $0x2c] sm:$0xf]
    %v353 = vld [vmem:[%s6 + $0x30] sm:$0xf]
    %v354 = vld [vmem:[%s6 + $0x34] sm:$0xf]
    %v355 = vld [vmem:[%s6 + $0x38] sm:$0xf]
    %v356 = vld [vmem:[%s6 + $0x3c] sm:$0xf]
    %v357 = vld [vmem:[%s7] sm:$0x1]
    %v359 = vperm.slane %v357, 0
    %v377 = vunpack.c.l.b16 %v341
    %v378 = vunpack.c.l.b16 %v342
    %v379 = vunpack.c.l.b16 %v343
    %v380 = vunpack.c.l.b16 %v344
    %v381 = vunpack.c.l.b16 %v345
    %v382 = vunpack.c.l.b16 %v346
    %v383 = vunpack.c.l.b16 %v347
    %v384 = vunpack.c.l.b16 %v348
    %v385 = vunpack.c.l.b16 %v349
    %v386 = vunpack.c.l.b16 %v350
    %v387 = vunpack.c.l.b16 %v351
    %v388 = vunpack.c.l.b16 %v352
    %v389 = vunpack.c.l.b16 %v353
    %v390 = vunpack.c.l.b16 %v354
    %v391 = vunpack.c.l.b16 %v355
    %v392 = vunpack.c.l.b16 %v356
    %v393 = vpack.c.b16 %v378, %v377
    %v394 = vpack.c.b16 %v380, %v379
    %v395 = vpack.c.b16 %v382, %v381
    %v396 = vpack.c.b16 %v384, %v383
    %v397 = vpack.c.b16 %v386, %v385
    %v398 = vpack.c.b16 %v388, %v387
    %v399 = vpack.c.b16 %v390, %v389
    %v400 = vpack.c.b16 %v392, %v391
    %409 = vmatpush.bf16.msra.mxu0 %v400
    %410 = vmatpush.bf16.msra.mxu0 %v399
    %411 = vmatpush.bf16.msra.mxu0 %v398
    %412 = vmatpush.bf16.msra.mxu0 %v397
    %413 = vmatpush.bf16.msra.mxu0 %v396
    %414 = vmatpush.bf16.msra.mxu0 %v395
    %415 = vmatpush.bf16.msra.mxu0 %v394
    %416 = vmatpush.bf16.msra.mxu0 %v393
    %417 = vmatmul.bf16.gmra.mxu0 %v340
    %v418 = vpop.f32.mrf.mxu0
    %v419 = vadd.f32 %v359, %v418
    %v420 = vpop.f32.mrf.mxu0
    %421 = vdwg.mxu0
    %v422 = vmax.f32 %v419, 0.0
    %v423 = vpack.c.bf16 %v422, %v422
    %v424 = vld [vmem:[%s8] sm:$0xf]
    %v425 = vld [vmem:[%s8 + $0x4] sm:$0xf]
    %v426 = vld [vmem:[%s8 + $0x8] sm:$0xf]
    %v427 = vld [vmem:[%s8 + $0xc] sm:$0xf]
    %v428 = vld [vmem:[%s8 + $0x10] sm:$0xf]
    %v429 = vld [vmem:[%s8 + $0x14] sm:$0xf]
    %v430 = vld [vmem:[%s8 + $0x18] sm:$0xf]
    %v431 = vld [vmem:[%s8 + $0x1c] sm:$0xf]
    %v432 = vld [vmem:[%s8 + $0x20] sm:$0xf]
    %v433 = vld [vmem:[%s8 + $0x24] sm:$0xf]
    %v434 = vld [vmem:[%s8 + $0x28] sm:$0xf]
    %v435 = vld [vmem:[%s8 + $0x2c] sm:$0xf]
    %v436 = vld [vmem:[%s8 + $0x30] sm:$0xf]
    %v437 = vld [vmem:[%s8 + $0x34] sm:$0xf]
    %v438 = vld [vmem:[%s8 + $0x38] sm:$0xf]
    %v439 = vld [vmem:[%s8 + $0x3c] sm:$0xf]
    %v440 = vld [vmem:[%s9] sm:$0x1]
    %v442 = vperm.slane %v440, 0
    %v460 = vunpack.c.l.b16 %v424
    %v461 = vunpack.c.l.b16 %v425
    %v462 = vunpack.c.l.b16 %v426
    %v463 = vunpack.c.l.b16 %v427
    %v464 = vunpack.c.l.b16 %v428
    %v465 = vunpack.c.l.b16 %v429
    %v466 = vunpack.c.l.b16 %v430
    %v467 = vunpack.c.l.b16 %v431
    %v468 = vunpack.c.l.b16 %v432
    %v469 = vunpack.c.l.b16 %v433
    %v470 = vunpack.c.l.b16 %v434
    %v471 = vunpack.c.l.b16 %v435
    %v472 = vunpack.c.l.b16 %v436
    %v473 = vunpack.c.l.b16 %v437
    %v474 = vunpack.c.l.b16 %v438
    %v475 = vunpack.c.l.b16 %v439
    %v476 = vpack.c.b16 %v461, %v460
    %v477 = vpack.c.b16 %v463, %v462
    %v478 = vpack.c.b16 %v465, %v464
    %v479 = vpack.c.b16 %v467, %v466
    %v480 = vpack.c.b16 %v469, %v468
    %v481 = vpack.c.b16 %v471, %v470
    %v482 = vpack.c.b16 %v473, %v472
    %v483 = vpack.c.b16 %v475, %v474
    %492 = vmatpush.bf16.msra.mxu0 %v483
    %493 = vmatpush.bf16.msra.mxu0 %v482
    %494 = vmatpush.bf16.msra.mxu0 %v481
    %495 = vmatpush.bf16.msra.mxu0 %v480
    %496 = vmatpush.bf16.msra.mxu0 %v479
    %497 = vmatpush.bf16.msra.mxu0 %v478
    %498 = vmatpush.bf16.msra.mxu0 %v477
    %499 = vmatpush.bf16.msra.mxu0 %v476
    %500 = vmatmul.bf16.gmra.mxu0 %v423
    %v501 = vpop.f32.mrf.mxu0
    %v502 = vadd.f32 %v442, %v501
    %v503 = vpop.f32.mrf.mxu0
    %504 = vdwg.mxu0
    %v505 = vmax.f32 %v502, 0.0
    %v506 = vpack.c.bf16 %v505, %v505
    %v507 = vld [vmem:[%s10] sm:$0xf]
    %v508 = vld [vmem:[%s10 + $0x4] sm:$0xf]
    %v509 = vld [vmem:[%s10 + $0x8] sm:$0xf]
    %v510 = vld [vmem:[%s10 + $0xc] sm:$0xf]
    %v511 = vld [vmem:[%s10 + $0x10] sm:$0xf]
    %v512 = vld [vmem:[%s10 + $0x14] sm:$0xf]
    %v513 = vld [vmem:[%s10 + $0x18] sm:$0xf]
    %v514 = vld [vmem:[%s10 + $0x1c] sm:$0xf]
    %v515 = vld [vmem:[%s10 + $0x20] sm:$0xf]
    %v516 = vld [vmem:[%s10 + $0x24] sm:$0xf]
    %v517 = vld [vmem:[%s10 + $0x28] sm:$0xf]
    %v518 = vld [vmem:[%s10 + $0x2c] sm:$0xf]
    %v519 = vld [vmem:[%s10 + $0x30] sm:$0xf]
    %v520 = vld [vmem:[%s10 + $0x34] sm:$0xf]
    %v521 = vld [vmem:[%s10 + $0x38] sm:$0xf]
    %v522 = vld [vmem:[%s10 + $0x3c] sm:$0xf]
    %v523 = vld [vmem:[%s11] sm:$0x1]
    %v525 = vperm.slane %v523, 0
    %v543 = vunpack.c.l.b16 %v507
    %v544 = vunpack.c.l.b16 %v508
    %v545 = vunpack.c.l.b16 %v509
    %v546 = vunpack.c.l.b16 %v510
    %v547 = vunpack.c.l.b16 %v511
    %v548 = vunpack.c.l.b16 %v512
    %v549 = vunpack.c.l.b16 %v513
    %v550 = vunpack.c.l.b16 %v514
    %v551 = vunpack.c.l.b16 %v515
    %v552 = vunpack.c.l.b16 %v516
    %v553 = vunpack.c.l.b16 %v517
    %v554 = vunpack.c.l.b16 %v518
    %v555 = vunpack.c.l.b16 %v519
    %v556 = vunpack.c.l.b16 %v520
    %v557 = vunpack.c.l.b16 %v521
    %v558 = vunpack.c.l.b16 %v522
    %v559 = vpack.c.b16 %v544, %v543
    %v560 = vpack.c.b16 %v546, %v545
    %v561 = vpack.c.b16 %v548, %v547
    %v562 = vpack.c.b16 %v550, %v549
    %v563 = vpack.c.b16 %v552, %v551
    %v564 = vpack.c.b16 %v554, %v553
    %v565 = vpack.c.b16 %v556, %v555
    %v566 = vpack.c.b16 %v558, %v557
    %575 = vmatpush.bf16.msra.mxu0 %v566
    %576 = vmatpush.bf16.msra.mxu0 %v565
    %577 = vmatpush.bf16.msra.mxu0 %v564
    %578 = vmatpush.bf16.msra.mxu0 %v563
    %579 = vmatpush.bf16.msra.mxu0 %v562
    %580 = vmatpush.bf16.msra.mxu0 %v561
    %581 = vmatpush.bf16.msra.mxu0 %v560
    %582 = vmatpush.bf16.msra.mxu0 %v559
    %583 = vmatmul.bf16.gmra.mxu0 %v506
    %v584 = vpop.f32.mrf.mxu0
    %v585 = vadd.f32 %v525, %v584
    %v586 = vpop.f32.mrf.mxu0
    %587 = vdwg.mxu0
    %588 = vmax.xlane.f32.xlu0 %v585
    %v589 = vpop.xlane.xlu0 %588
    %v590 = vsub.f32 %v585, %v589
    %v591 = vmul.f32 %v590, 1.442695
    %v592 = vpow.pop %v591
    %593 = vadd.xlane.f32.xlu0 %v592
    %v594 = vpop.xlane.xlu0 %593
    %v595 = vlog2.pop %v594
    %v596 = vmul.f32 %v595, 0.6931472
    %v597 = vsub.f32 %v590, %v596
    %598 = vst [vmem:[%s12] sm:$0xff] %v597
    // Predicated region
    $region54: #{classifier_forward.1} parent=1 // pred_check
      _
    $region55: #{classifier_forward.1} parent=1 // pred_check_branch
      %600 = sbr.rel (0) target = $region57
    $region56: #{classifier_forward.1} parent=1 // pred_region
      _
    $region57: #{classifier_forward.1} parent=1 // pred_fallthru
      _
    // Predicated region
    $region58: #{classifier_forward.1} parent=1 // pred_check
      _
    $region59: #{classifier_forward.1} parent=1 // pred_check_branch
      %602 = sbr.rel (0) target = $region61
    $region60: #{classifier_forward.1} parent=1 // pred_region
      _
    $region61: #{classifier_forward.1} parent=1 // pred_fallthru
      _
    %603 = vsyncpa [#allocation3], 1

</llo_original>
